<compile_context>
chip_gen: v7x
topology: tpu7x:2x2x1
jax: 0.10.0
libtpu: 0.0.40
codegen_flags: <defaults>
</compile_context>

<pallas_src>
import functools

import jax
import jax.numpy as jnp
from jax.experimental import pallas as pl
from jax.experimental.pallas import tpu as pltpu


def _round_up(x: int, m: int) -> int:
    return ((x + m - 1) // m) * m


# Weight (bf16) footprint below which we keep the whole [K, N] weight as a single
# VMEM-resident block (fast path).
_SMALL_WEIGHT_BYTES = 2 * 1024 * 1024


# ----------------------------------------------------------------------------- #
# Fast path: whole weight resident in VMEM, 1-D grid over M, no reduction axis.
# ----------------------------------------------------------------------------- #
def _linear_small_kernel(x_ref, w_ref, b_ref, o_ref):
    """x_ref: [TM, K] f32, w_ref: [K, N] bf16, b_ref: [1, N] f32, o_ref: [TM, N] f32."""
    o_ref[...] = (
        jnp.dot(
            x_ref[...].astype(jnp.bfloat16),
            w_ref[...],
            preferred_element_type=jnp.float32,
        )
        + b_ref[...]
    ).astype(o_ref.dtype)


def _choose_tm_small(M: int, K: int, N: int, cap: int = 1024) -> int:
    # Keep the streamed x/out blocks (double-buffered) to a few MiB so the fast
    # path fits every generation's scoped-VMEM default (v5e 16, v6e/v7x 32 MiB).
    per_row_bytes = 4 * (K + N)
    tm = min(cap, max(8, (3 * 1024 * 1024) // per_row_bytes))
    tm = max(8, (tm // 8) * 8)
    if M <= 8:
        return M  # single tiny block; block dim == full dim is always legal
    tm = min(tm, _round_up(M, 8))
    # Guarantee >=2 blocks along the single parallel axis (both v7x TensorCores).
    if pl.cdiv(M, tm) < 2:
        tm = max(8, _round_up(pl.cdiv(M, 2), 8))
    return tm


@jax.jit
def _pallas_linear_small(x, w, b2):
    """x: [M, K] f32, w: [K, N] bf16, b2: [1, N] f32 -> [M, N] f32. No padding/slicing."""
    M, K = x.shape
    Kw, N = w.shape
    assert K == Kw and b2.shape == (1, N)

    tm = _choose_tm_small(M, K, N)
    grid = (pl.cdiv(M, tm),)

    cost = pl.CostEstimate(
        flops=2 * M * K * N,
        transcendentals=0,
        bytes_accessed=M * K * 4 + K * N * 2 + N * 4 + M * N * 4,
    )

    return pl.pallas_call(
        _linear_small_kernel,
        out_shape=jax.ShapeDtypeStruct((M, N), jnp.float32),
        grid_spec=pltpu.PrefetchScalarGridSpec(
            num_scalar_prefetch=0,
            grid=grid,
            in_specs=[
                pl.BlockSpec((tm, K), lambda i: (i, 0)),   # activations, streamed over M
                pl.BlockSpec((K, N), lambda i: (0, 0)),    # weight: one block, VMEM-resident
                pl.BlockSpec((1, N), lambda i: (0, 0)),    # bias: resident
            ],
            out_specs=pl.BlockSpec((tm, N), lambda i: (i, 0)),
        ),
        compiler_params=pltpu.CompilerParams(
            dimension_semantics=("parallel",),
        ),
        cost_estimate=cost,
    )(x, w, b2)


# ----------------------------------------------------------------------------- #
# Fallback path: tiled matmul with K reduction (large weights).
# ----------------------------------------------------------------------------- #
def _linear_tiled_kernel(x_ref, w_ref, b_ref, o_ref, acc_ref):
    """x_ref: [TM, TK] f32, w_ref: [TK, TN] bf16, b_ref: [1, TN] f32, o_ref: [TM, TN] f32."""
    k = pl.program_id(2)

    @pl.when(k == 0)
    def _():
        acc_ref[...] = jnp.zeros_like(acc_ref)

    acc_ref[...] += jnp.dot(
        x_ref[...].astype(jnp.bfloat16),
        w_ref[...],
        preferred_element_type=jnp.float32,
    )

    @pl.when(k == pl.num_programs(2) - 1)
    def _():
        o_ref[...] = (acc_ref[...] + b_ref[...]).astype(o_ref.dtype)


@functools.partial(jax.jit, static_argnames=("n_out",))
def _pallas_linear_tiled(x, w_p, b_p, *, n_out):
    """x: [M, K] f32, w_p: [Kp, Np] bf16 (padded at init), b_p: [1, Np] f32 -> [M, n_out]."""
    M, K = x.shape
    Kp, Np = w_p.shape

    tm = min(512, _round_up(M, 8))
    tn = min(512, Np)   # Np was padded to a multiple of this at init
    tk = min(1024, Kp)  # Kp was padded to a multiple of this at init

    # Only the K overhang of x must be zero-padded (garbage there would corrupt
    # the reduction). M edge blocks are handled by Pallas masked stores.
    if Kp != K:
        x = jnp.pad(x, ((0, 0), (0, Kp - K)))

    grid = (pl.cdiv(M, tm), Np // tn, Kp // tk)

    cost = pl.CostEstimate(
        flops=2 * M * Kp * Np,
        transcendentals=0,
        bytes_accessed=M * Kp * 4 + Kp * Np * 2 + Np * 4 + M * Np * 4,
    )

    out = pl.pallas_call(
        _linear_tiled_kernel,
        out_shape=jax.ShapeDtypeStruct((M, Np), jnp.float32),
        grid_spec=pltpu.PrefetchScalarGridSpec(
            num_scalar_prefetch=0,
            grid=grid,
            in_specs=[
                pl.BlockSpec((tm, tk), lambda i, j, k: (i, k)),   # activations
                pl.BlockSpec((tk, tn), lambda i, j, k: (k, j)),   # weight tile
                pl.BlockSpec((1, tn), lambda i, j, k: (0, j)),    # bias tile
            ],
            out_specs=pl.BlockSpec((tm, tn), lambda i, j, k: (i, j)),
            scratch_shapes=[pltpu.VMEM((tm, tn), jnp.float32)],
        ),
        compiler_params=pltpu.CompilerParams(
            dimension_semantics=("parallel", "parallel", "arbitrary"),
        ),
        cost_estimate=cost,
    )(x, w_p, b_p)

    return out if Np == n_out else out[:, :n_out]


# ----------------------------------------------------------------------------- #
# Module
# ----------------------------------------------------------------------------- #
class FullyConnectNNPallas:
    """JAX/Pallas re-implementation of FullyConnectNN(in_dim, out_dim)."""

    def __init__(self, in_dim, out_dim, key):
        self.in_dim = in_dim
        self.out_dim = out_dim
        # xavier_normal_: std = sqrt(2 / (fan_in + fan_out)); bias = 0.
        std = (2.0 / (in_dim + out_dim)) ** 0.5
        w = jax.random.normal(key, (in_dim, out_dim), dtype=jnp.float32) * std

        # bf16 weight storage (halves weight HBM traffic; MXU is bf16-native on
        # v5e/v6e/v7x). Accumulation in the kernel stays f32.
        self.small = in_dim * out_dim * 2 <= _SMALL_WEIGHT_BYTES
        if self.small:
            # Whole weight lives in VMEM as one block: no padding needed at all.
            self.w = w.astype(jnp.bfloat16)
            self.b2 = jnp.zeros((1, out_dim), dtype=jnp.float32)
        else:
            # Pad ONCE at init (never per forward call) to the tiled-path tiling.
            tk = min(1024, _round_up(in_dim, 128))
            tn = min(512, _round_up(out_dim, 128))
            kp = _round_up(in_dim, tk)
            np_ = _round_up(out_dim, tn)
            self.w = jnp.pad(
                w, ((0, kp - in_dim), (0, np_ - out_dim))
            ).astype(jnp.bfloat16)
            self.b2 = jnp.zeros((1, np_), dtype=jnp.float32)

    def __call__(self, x):
        lead = x.shape[:-1]
        h = x.reshape(-1, self.in_dim)
        if self.small:
            out = _pallas_linear_small(h, self.w, self.b2)
        else:
            out = _pallas_linear_tiled(h, self.w, self.b2, n_out=self.out_dim)
        return out.reshape(*lead, self.out_dim)


def _reference(mod: FullyConnectNNPallas, x):
    # Matched-numerics reference: same bf16 MXU inputs, f32 accumulation.
    h = x.reshape(-1, x.shape[-1]).astype(jnp.bfloat16)
    w = mod.w[: mod.in_dim, : mod.out_dim]
    b = mod.b2[:, : mod.out_dim]
    out = jnp.dot(h, w, preferred_element_type=jnp.float32) + b
    return out.reshape(*x.shape[:-1], mod.out_dim)


if __name__ == "__main__":
    key = jax.random.PRNGKey(0)
    key, wkey, xkey = jax.random.split(key, 3)

    batch, seq, in_dim, out_dim = 2, 8, 16, 32
    x = jax.random.normal(xkey, (batch, seq, in_dim), dtype=jnp.float32)

    mod = FullyConnectNNPallas(in_dim, out_dim, wkey)
    out = mod(x)
    out = jax.block_until_ready(out)

    ref = _reference(mod, x)
    assert out.shape == (batch, seq, out_dim), out.shape
    assert jnp.allclose(out, ref, atol=1e-2, rtol=1e-2), "mismatch vs reference"
    print("KERNEL_OK")
</pallas_src>

<mosaic_0001>
module attributes {stable_mosaic.version = 11 : i64} {
  func.func @_linear_small_kernel(%arg0: i32, %arg1: memref<8x16xf32, #tpu.memory_space<vmem>>, %arg2: memref<16x32xbf16, #tpu.memory_space<vmem>>, %arg3: memref<1x32xf32, #tpu.memory_space<vmem>>, %arg4: memref<8x32xf32, #tpu.memory_space<vmem>>) attributes {dimension_semantics = [#tpu.dimension_semantics<parallel>], iteration_bounds = array<i64: 2>, scalar_prefetch = 0 : i64, scratch_operands = 0 : i64, tpu.core_type = #tpu.core_type<tc>, window_params = [{transform_indices = @transform_0, window_bounds = array<i64: 8, 16>}, {pipeline_mode = #tpu.pipeline_mode<synchronous>, transform_indices = @transform_1, window_bounds = array<i64: 16, 32>}, {pipeline_mode = #tpu.pipeline_mode<synchronous>, transform_indices = @transform_2, window_bounds = array<i64: 1, 32>}, {transform_indices = @transform_3, window_bounds = array<i64: 8, 32>}]} {
    %c0 = arith.constant 0 : index
    %c0_0 = arith.constant 0 : index
    %0 = vector.load %arg1[%c0, %c0_0] : memref<8x16xf32, #tpu.memory_space<vmem>>, vector<8x16xf32>
    %1 = arith.truncf %0 : vector<8x16xf32> to vector<8x16xbf16>
    %c0_1 = arith.constant 0 : index
    %c0_2 = arith.constant 0 : index
    %2 = vector.load %arg2[%c0_1, %c0_2] : memref<16x32xbf16, #tpu.memory_space<vmem>>, vector<16x32xbf16>
    %cst = arith.constant dense<0.000000e+00> : vector<8x32xf32>
    %3 = tpu.matmul %1, %2, %cst {dimension_numbers = #tpu.dot_dimension_numbers<[1], [0], [0], [1], [0, 0, 1, 1], [], []>} : vector<8x16xbf16>, vector<16x32xbf16>, vector<8x32xf32> -> vector<8x32xf32>
    %c0_3 = arith.constant 0 : index
    %c0_4 = arith.constant 0 : index
    %4 = vector.load %arg3[%c0_3, %c0_4] : memref<1x32xf32, #tpu.memory_space<vmem>>, vector<1x32xf32>
    %5 = vector.broadcast %4 : vector<1x32xf32> to vector<8x32xf32>
    %6 = arith.addf %3, %5 : vector<8x32xf32>
    %c0_5 = arith.constant 0 : index
    %c0_6 = arith.constant 0 : index
    %7 = vector.load %arg4[%c0_5, %c0_6] : memref<8x32xf32, #tpu.memory_space<vmem>>, vector<8x32xf32>
    tpu.vector_store %arg4[%c0_5, %c0_6], %6 {strides = array<i32>} : memref<8x32xf32, #tpu.memory_space<vmem>>, vector<8x32xf32>,
    return
  }
  func.func @transform_0(%arg0: i32) -> (i32, i32) {
    %c0_i32 = arith.constant 0 : i32
    %c0_i32_0 = arith.constant 0 : i32
    return %arg0, %c0_i32 : i32, i32
  }
  func.func @transform_1(%arg0: i32) -> (i32, i32) {
    %c0_i32 = arith.constant 0 : i32
    %c0_i32_0 = arith.constant 0 : i32
    %c0_i32_1 = arith.constant 0 : i32
    return %c0_i32, %c0_i32_0 : i32, i32
  }
  func.func @transform_2(%arg0: i32) -> (i32, i32) {
    %c0_i32 = arith.constant 0 : i32
    %c0_i32_0 = arith.constant 0 : i32
    %c0_i32_1 = arith.constant 0 : i32
    return %c0_i32, %c0_i32_0 : i32, i32
  }
  func.func @transform_3(%arg0: i32) -> (i32, i32) {
    %c0_i32 = arith.constant 0 : i32
    %c0_i32_0 = arith.constant 0 : i32
    return %arg0, %c0_i32 : i32, i32
  }
}

</mosaic_0001>

<llo_original>
// kernel: _pallas_linear_small.1
$region0: #{_pallas_linear_small.1}
  #allocation0 [shape = 'u32[]', space=smem, size = 0x4, offset = 0x4, fixed_abs, tag = 'smem constant byte address 0x4 - core index']
  #allocation1 [shape = 'u32[144,128]{1,0:T(1,128)}', space=vmem, size = 0x12000, scoped, tag = 'internal scratch']
  %s0 = inlined_call_operand.hbm [shape: f32[16,16], index: 0, kind: input, shape index: {}]
  %s1 = inlined_call_operand.hbm [shape: bf16[16,32], index: 1, kind: input, shape index: {}]
  %s2 = inlined_call_operand.vmem [shape: f32[1,32], index: 2, kind: input, shape index: {}]
  %s3 = inlined_call_operand.hbm [shape: f32[16,32], index: 3, kind: output, shape index: {}]
  %s4 = sld [smem:[#allocation0]]
  $region53: #{_pallas_linear_small.1} parent=0
    _
  %s6 = ssub.s32 1, %s4
  %s7 = scalar_select 0, %s6, %s4
  $region1: #{_pallas_linear_small.1} parent=0
    #allocation2 [shape = 'u8[8192]{0}', space=vmem, size = 0x2000, scoped, tag = 'input window, operand 0']
    #allocation3 [shape = 's32[2]{0}', space=sflag, size = 0x8, scoped, tag = 'scoped memory for _pallas_linear_small.1']
    #allocation4 [shape = 's32[2]{0}', space=sflag, size = 0x8, scoped, tag = 'scoped memory for _pallas_linear_small.1']
    #allocation5 [shape = 'u8[4096]{0}', space=vmem, size = 0x1000, scoped, tag = 'input window, operand 1, single buffered']
    #allocation6 [shape = 's32[1]{0}', space=sflag, size = 0x4, scoped, tag = 'scoped memory for _pallas_linear_small.1']
    #allocation7 [shape = 'u8[8192]{0}', space=vmem, size = 0x2000, scoped, tag = 'output window, operand 0']
    %8 = vsyncpa [#allocation3], 0
    %s9 = scalar_lea.sflag [#allocation3], 1
    %10 = vsyncpa %s9, 0
    %11 = vsyncpa [#allocation6], 0
    %12 = vsyncpa [#allocation4], 0
    %s13 = scalar_lea.sflag [#allocation4], 1
    %14 = vsyncpa %s13, 0
    loop: start=0, step=1, limit=4
    $region2: #{_pallas_linear_small.1} parent=1 // loop_pre_header
      _
    $region3: #{_pallas_linear_small.1} parent=1 // loop_header
      %s16 = sphi 0, %s20
      %p17 = scmp.ge.s32.totalorder %s16, 4
      %s26 = sphi 0, %s28
      %s29 = sphi 0, %s26
      %s30 = sphi 0, %s29
      %s46 = sphi 0, %s30
      %s50 = sphi 0, %s50
      %s52 = sphi 0, %s50
      %s53 = sphi 0, %s52
      %s67 = sphi 0, %s53
      %s71 = sphi 0, %s71
      %s73 = sphi 0, %s71
      %s74 = sphi 0, %s73
      %s88 = sphi 0, %s74
      %s94 = sphi 0, %s96
      %s97 = sphi 0, %s94
      %s98 = sphi 0, %s97
      %s114 = sphi 0, %s98
    $region4: #{_pallas_linear_small.1} parent=1 // loop_header_branch
      %19 = sbr.rel (%p17) target = $region8
    $region5: #{_pallas_linear_small.1} parent=1 // loop_body
      %s21 = ssub.s32 %s16, 1
      %s22 = ssub.s32 %s16, 2
      %s23 = sadd.s32 %s16, 1
      %s24 = ssub.s32 %s16, %s23
      %p25 = scmp.eq.s32.totalorder %s24, 0
      %s27 = sadd.s32 %s26, 1
      %s28 = scalar_select %p25, %s26, %s27
      %p31 = pneg %p25
      %p32 = scmp.eq.s32.totalorder %s16, 1
      %p33 = por %p31, %p32
      %p34 = scmp.ne.s32.totalorder %s26, %s29
      %p35 = scmp.eq.s32.totalorder %s16, 0
      %p36 = por %p34, %p35
      %p37 = scmp.ne.s32.totalorder %s26, %s29
      %p38 = scmp.eq.s32.totalorder %s21, 1
      %p39 = por %p37, %p38
      %p40 = scmp.ne.s32.totalorder %s29, %s30
      %p41 = scmp.eq.s32.totalorder %s21, 0
      %p42 = por %p40, %p41
      %p43 = scmp.ne.s32.totalorder %s29, %s30
      %p44 = scmp.eq.s32.totalorder %s22, 1
      %p45 = por %p43, %p44
      %p47 = scmp.ne.s32.totalorder %s30, %s46
      %p48 = scmp.eq.s32.totalorder %s22, 0
      %p49 = por %p47, %p48
      %s51 = sadd.s32 %s50, 1
      %p54 = scmp.eq.s32.totalorder %s16, 1
      %p55 = scmp.ne.s32.totalorder %s50, %s52
      %p56 = scmp.eq.s32.totalorder %s16, 0
      %p57 = por %p55, %p56
      %p58 = scmp.ne.s32.totalorder %s50, %s52
      %p59 = scmp.eq.s32.totalorder %s21, 1
      %p60 = por %p58, %p59
      %p61 = scmp.ne.s32.totalorder %s52, %s53
      %p62 = scmp.eq.s32.totalorder %s21, 0
      %p63 = por %p61, %p62
      %p64 = scmp.ne.s32.totalorder %s52, %s53
      %p65 = scmp.eq.s32.totalorder %s22, 1
      %p66 = por %p64, %p65
      %p68 = scmp.ne.s32.totalorder %s53, %s67
      %p69 = scmp.eq.s32.totalorder %s22, 0
      %p70 = por %p68, %p69
      %s72 = sadd.s32 %s71, 1
      %p75 = scmp.eq.s32.totalorder %s16, 1
      %p76 = scmp.ne.s32.totalorder %s71, %s73
      %p77 = scmp.eq.s32.totalorder %s16, 0
      %p78 = por %p76, %p77
      %p79 = scmp.ne.s32.totalorder %s71, %s73
      %p80 = scmp.eq.s32.totalorder %s21, 1
      %p81 = por %p79, %p80
      %p82 = scmp.ne.s32.totalorder %s73, %s74
      %p83 = scmp.eq.s32.totalorder %s21, 0
      %p84 = por %p82, %p83
      %p85 = scmp.ne.s32.totalorder %s73, %s74
      %p86 = scmp.eq.s32.totalorder %s22, 1
      %p87 = por %p85, %p86
      %p89 = scmp.ne.s32.totalorder %s74, %s88
      %p90 = scmp.eq.s32.totalorder %s22, 0
      %p91 = por %p89, %p90
      %s92 = ssub.s32 %s16, %s23
      %p93 = scmp.eq.s32.totalorder %s92, 0
      %s95 = sadd.s32 %s94, 1
      %s96 = scalar_select %p93, %s94, %s95
      %p99 = pneg %p93
      %p100 = scmp.eq.s32.totalorder %s16, 1
      %p101 = por %p99, %p100
      %p102 = scmp.ne.s32.totalorder %s94, %s97
      %p103 = scmp.eq.s32.totalorder %s16, 0
      %p104 = por %p102, %p103
      %p105 = scmp.ne.s32.totalorder %s94, %s97
      %p106 = scmp.eq.s32.totalorder %s21, 1
      %p107 = por %p105, %p106
      %p108 = scmp.ne.s32.totalorder %s97, %s98
      %p109 = scmp.eq.s32.totalorder %s21, 0
      %p110 = por %p108, %p109
      %p111 = scmp.ne.s32.totalorder %s97, %s98
      %p112 = scmp.eq.s32.totalorder %s22, 1
      %p113 = por %p111, %p112
      %p115 = scmp.ne.s32.totalorder %s98, %s114
      %p116 = scmp.eq.s32.totalorder %s22, 0
      %p117 = por %p115, %p116
      %p118 = scmp.le.s32.totalorder 1, %s16
      %p119 = scmp.lt.s32.totalorder %s16, 3
      %p120 = pnand %p118, %p119
      %p121 = pneg %p120
      // Predicated region
      $region9: #{_pallas_linear_small.1} parent=5 // pred_check
        _
      $region10: #{_pallas_linear_small.1} parent=5 // pred_check_branch
        %123 = sbr.rel (%p120) target = $region12
      $region11: #{_pallas_linear_small.1} parent=5 // pred_region
        %s124 = ssub.s32 %s16, 1
        // Predicated region
        $region13: #{_pallas_linear_small.1} parent=11 // pred_check
          %p125 = pneg %p63
        $region14: #{_pallas_linear_small.1} parent=11 // pred_check_branch
          %127 = sbr.rel (%p125) target = $region16
        $region15: #{_pallas_linear_small.1} parent=11 // pred_region
          %s129 = ssub.s32 128, 128
          %130 = vsyncadd [#allocation6], %s129
          %s131 = sshll.u32 [#allocation5], 4
          %s132 = int_to_ptr.vmem [resolvable:$true] %s131
          %137 = dma.hbm_to_vmem [thread:$0]  %s1, 128, %s132, [#allocation6], 64, 64, 4
        $region16: #{_pallas_linear_small.1} parent=11 // pred_fallthru
          _
        // Predicated region
        $region17: #{_pallas_linear_small.1} parent=11 // pred_check
          %p138 = pneg %p84
        $region18: #{_pallas_linear_small.1} parent=11 // pred_check_branch
          %140 = sbr.rel (%p138) target = $region20
        $region19: #{_pallas_linear_small.1} parent=11 // pred_region
          _
        $region20: #{_pallas_linear_small.1} parent=11 // pred_fallthru
          _
      $region12: #{_pallas_linear_small.1} parent=5 // pred_fallthru
        _
      %p141 = scmp.lt.s32.totalorder %s16, 2
      // Predicated region
      $region21: #{_pallas_linear_small.1} parent=5 // pred_check
        %p142 = pneg %p141
      $region22: #{_pallas_linear_small.1} parent=5 // pred_check_branch
        %144 = sbr.rel (%p142) target = $region24
      $region23: #{_pallas_linear_small.1} parent=5 // pred_region
        // Predicated region
        $region25: #{_pallas_linear_small.1} parent=23 // pred_check
          %p145 = pneg %p36
        $region26: #{_pallas_linear_small.1} parent=23 // pred_check_branch
          %147 = sbr.rel (%p145) target = $region28
        $region27: #{_pallas_linear_small.1} parent=23 // pred_region
          %s148 = sand.u32 %s26, 1
          %s149 = scalar_lea.sflag [#allocation3], %s148
          %s150 = sand.u32 %s26, 1
          %s151 = smul.addr %s150, 8
          %s152 = scalar_lea.vmem [#allocation2], %s151
          %s154 = ssub.s32 128, 128
          %155 = vsyncadd %s149, %s154
          %s156 = smul.addr %s16, 128
          %s157 = scalar_lea.hbm %s0, %s156
          %s159 = sshll.u32 %s152, 4
          %s160 = int_to_ptr.vmem [resolvable:$true] %s159
          %162 = dma.hbm_to_vmem [thread:$0]  %s157, 128, %s160, %s149
        $region28: #{_pallas_linear_small.1} parent=23 // pred_fallthru
          _
      $region24: #{_pallas_linear_small.1} parent=5 // pred_fallthru
        _
      %p163 = scmp.le.s32.totalorder 1, %s16
      %p164 = scmp.lt.s32.totalorder %s16, 3
      %p165 = pnand %p163, %p164
      %p166 = pneg %p165
      // Predicated region
      $region29: #{_pallas_linear_small.1} parent=5 // pred_check
        _
      $region30: #{_pallas_linear_small.1} parent=5 // pred_check_branch
        %168 = sbr.rel (%p165) target = $region32
      $region31: #{_pallas_linear_small.1} parent=5 // pred_region
        %s169 = ssub.s32 %s16, 1
        %s170 = sand.u32 %s29, 1
        %s171 = scalar_lea.sflag [#allocation3], %s170
        %s172 = sand.u32 %s29, 1
        %s173 = smul.addr %s172, 8
        %s174 = scalar_lea.vmem [#allocation2], %s173
        // Predicated region
        $region33: #{_pallas_linear_small.1} parent=31 // pred_check
          %p175 = pneg %p42
        $region34: #{_pallas_linear_small.1} parent=31 // pred_check_branch
          %177 = sbr.rel (%p175) target = $region36
        $region35: #{_pallas_linear_small.1} parent=31 // pred_region
          %178 = dma.done %s171, 128
        $region36: #{_pallas_linear_small.1} parent=31 // pred_fallthru
          _
        // Predicated region
        $region37: #{_pallas_linear_small.1} parent=31 // pred_check
          %p179 = pneg %p63
        $region38: #{_pallas_linear_small.1} parent=31 // pred_check_branch
          %181 = sbr.rel (%p179) target = $region40
        $region39: #{_pallas_linear_small.1} parent=31 // pred_region
          %182 = dma.done [#allocation6], 128
        $region40: #{_pallas_linear_small.1} parent=31 // pred_fallthru
          _
        %s183 = sand.u32 %s29, 1
        %s184 = scalar_lea.sflag [#allocation3], %s183
        %s185 = sand.u32 %s29, 1
        %s186 = smul.addr %s185, 8
        %s187 = scalar_lea.vmem [#allocation2], %s186
        %p188 = pneg %p42
        %p189 = pneg %p39
        %p190 = pneg %p63
        %p191 = pneg %p60
        %p192 = pneg %p84
        %p193 = pneg %p81
        %p194 = pneg %p110
        %p195 = pneg %p107
        %s196 = sand.u32 %s97, 1
        %s197 = scalar_lea.sflag [#allocation4], %s196
        %s198 = sand.u32 %s97, 1
        %s199 = smul.addr %s198, 8
        %s200 = scalar_lea.vmem [#allocation7], %s199
        %v202 = vld [vmem:[%s174] sm:$0xff]
        %v203 = vpack.c.bf16 %v202, %v202
        %v204 = vld [vmem:[#allocation5] sm:$0xf]
        %v205 = vld [vmem:[#allocation5 + $0x4] sm:$0xf]
        %v206 = vld [vmem:[%s2] sm:$0x1]
        %v208 = vlaneseq
        %v209 = vshrl.u32 %v208, 7
        %v210 = vsub.s32 0, %v209
        %v211 = vrot.slane %v206, %v210
        %v215 = vunpack.c.l.b16 %v204
        %v216 = vunpack.c.l.b16 %v205
        %v217 = vpack.c.b16 %v216, %v215
        %vm219 = vcmask 130048
        %v221 = vsel %vm219, %v203, 0
        %223 = vmatprep.subr.bf16.mxu0 0
        %224 = vmatpush1.bf16.msra.mxu0 %v217
        %225 = vmatprep.subr.bf16.mxu0 0
        %226 = vmatpush1.bf16.msra.mxu0 0
        %227 = vmatprep.subr.bf16.mxu0 0
        %228 = vmatpush1.bf16.msra.mxu0 0
        %229 = vmatprep.subr.bf16.mxu0 0
        %230 = vmatpush1.bf16.msra.mxu0 0
        %231 = vmatprep.subr.bf16.mxu0 0
        %232 = vmatpush1.bf16.msra.mxu0 0
        %233 = vmatprep.subr.bf16.mxu0 0
        %234 = vmatpush1.bf16.msra.mxu0 0
        %235 = vmatprep.subr.bf16.mxu0 0
        %236 = vmatpush1.bf16.msra.mxu0 0
        %237 = vmatprep.subr.bf16.mxu0 0
        %238 = vmatpush1.bf16.msra.mxu0 0
        %239 = vmatprep.subr.bf16.mxu0 0
        %240 = vmatpush1.bf16.msra.mxu0 0
        %241 = vmatprep.subr.bf16.mxu0 0
        %242 = vmatpush1.bf16.msra.mxu0 0
        %243 = vmatprep.subr.bf16.mxu0 0
        %244 = vmatpush1.bf16.msra.mxu0 0
        %245 = vmatprep.subr.bf16.mxu0 0
        %246 = vmatpush1.bf16.msra.mxu0 0
        %247 = vmatprep.subr.bf16.mxu0 0
        %248 = vmatpush1.bf16.msra.mxu0 0
        %249 = vmatprep.subr.bf16.mxu0 0
        %250 = vmatpush1.bf16.msra.mxu0 0
        %251 = vmatprep.subr.bf16.mxu0 0
        %252 = vmatpush1.bf16.msra.mxu0 0
        %253 = vmatprep.subr.bf16.mxu0 0
        %254 = vmatpush1.bf16.msra.mxu0 0
        %255 = vmatprep.mubr.bf16.mxu0 0
        %256 = vmatmul.mubr.bf16.gmra.mrb[0].mxu0 %v221
        %v257 = vpop.f32.mrb[0].mxu0
        %v258 = vadd.f32 %v211, %v257
        %v259 = vpop.f32.mrb[0].mxu0
        %v260 = vpop.f32.mrb[0].mxu0
        %v261 = vpop.f32.mrb[0].mxu0
        %262 = vdwg.mxu0
        %vm263 = vcmask 261120
        %264 = vst.msk [vmem:[%s200] sm:$0xff] %vm263, %v258
        %s265 = sand.u32 %s97, 1
        %s266 = scalar_lea.sflag [#allocation4], %s265
        %s267 = sand.u32 %s97, 1
        %s268 = smul.addr %s267, 8
        %s269 = scalar_lea.vmem [#allocation7], %s268
        // Predicated region
        $region41: #{_pallas_linear_small.1} parent=31 // pred_check
          %p270 = pneg %p107
        $region42: #{_pallas_linear_small.1} parent=31 // pred_check_branch
          %272 = sbr.rel (%p270) target = $region44
        $region43: #{_pallas_linear_small.1} parent=31 // pred_region
          %s274 = ssub.s32 128, 128
          %275 = vsyncadd %s266, %s274
          %s276 = smul.addr %s21, 128
          %s277 = scalar_lea.hbm %s3, %s276
          %s279 = sshll.u32 %s269, 4
          %s280 = int_to_ptr.vmem [resolvable:$true] %s279
          %282 = dma.vmem_to_hbm [thread:$0]  %s280, 128, %s277, %s266
        $region44: #{_pallas_linear_small.1} parent=31 // pred_fallthru
          _
      $region32: #{_pallas_linear_small.1} parent=5 // pred_fallthru
        _
      %p283 = scmp.le.s32.totalorder 2, %s16
      // Predicated region
      $region45: #{_pallas_linear_small.1} parent=5 // pred_check
        %p284 = pneg %p283
      $region46: #{_pallas_linear_small.1} parent=5 // pred_check_branch
        %286 = sbr.rel (%p284) target = $region48
      $region47: #{_pallas_linear_small.1} parent=5 // pred_region
        %s287 = ssub.s32 %s16, 2
        // Predicated region
        $region49: #{_pallas_linear_small.1} parent=47 // pred_check
          %p288 = pneg %p113
        $region50: #{_pallas_linear_small.1} parent=47 // pred_check_branch
          %290 = sbr.rel (%p288) target = $region52
        $region51: #{_pallas_linear_small.1} parent=47 // pred_region
          %s291 = sand.u32 %s98, 1
          %s292 = scalar_lea.sflag [#allocation4], %s291
          %s293 = sand.u32 %s98, 1
          %s294 = smul.addr %s293, 8
          %s295 = scalar_lea.vmem [#allocation7], %s294
          %296 = dma.done %s292, 128
        $region52: #{_pallas_linear_small.1} parent=47 // pred_fallthru
          _
      $region48: #{_pallas_linear_small.1} parent=5 // pred_fallthru
        _
    $region6: #{_pallas_linear_small.1} parent=1 // loop_footer
      %s20 = sadd.s32 1, %s16
    $region7: #{_pallas_linear_small.1} parent=1 // loop_footer_branch
      %15 = sbr.rel target = $region3
    $region8: #{_pallas_linear_small.1} parent=1 // loop_exit
      _
    %297 = vsyncpa [#allocation3], 1
    %s298 = scalar_lea.sflag [#allocation3], 1
    %299 = vsyncpa %s298, 1
    %300 = vsyncpa [#allocation6], 1
    %301 = vsyncpa [#allocation4], 1
    %s302 = scalar_lea.sflag [#allocation4], 1
    %303 = vsyncpa %s302, 1

</llo_original>
